<compile_context>
chip_gen: v7x
topology: tpu7x:2x2x1
jax: 0.10.0
libtpu: 0.0.40
codegen_flags: <defaults>
</compile_context>

<pallas_src>
import functools

import jax
import jax.numpy as jnp
from jax.experimental import pallas as pl
from jax.experimental.pallas import tpu as pltpu

_LANE = 128       # vreg lane width (last dim alignment)
_ROW_ALIGN = 16   # bf16 packs 2 rows per sublane -> keep M extents 16-aligned


def _round_up(x, m):
    return (x + m - 1) // m * m


def _cdiv(a, b):
    return -(-a // b)


@functools.lru_cache(maxsize=None)
def _vmem_capacity_bytes():
    try:
        return int(pltpu.get_tpu_info().vmem_capacity_bytes)
    except Exception:
        return 64 << 20  # conservative (v7x per-TC VMEM)


# ---------------------------------------------------------------------------
# Fused kernel: chain of Linear(+ReLU) layers applied to one M-tile.
# ---------------------------------------------------------------------------
def _fused_mlp_kernel(x_ref, *refs, n_layers, final_relu):
    # refs = (w0, b0, w1, b1, ..., w_{L-1}, b_{L-1}, o_ref)
    o_ref = refs[-1]
    h = x_ref[...].astype(jnp.bfloat16)             # in-kernel cast (VPU, hides under MXU)
    for i in range(n_layers):                       # static unroll over layers
        w = refs[2 * i][...]                        # (K_pad, N_pad) bf16
        b = refs[2 * i + 1][...]                    # (1, N_pad)    f32
        acc = jnp.dot(h, w, preferred_element_type=jnp.float32) + b
        last = i == n_layers - 1
        if (not last) or final_relu:
            acc = jnp.maximum(acc, 0.0)             # ReLU in f32 on the VPU
        if not last:
            h = acc.astype(jnp.bfloat16)            # bf16 operand for next MXU pass
        else:
            o_ref[...] = acc.astype(o_ref.dtype)    # lane-dense (tile, N_pad) store


# ---------------------------------------------------------------------------
# Parameter handling
# ---------------------------------------------------------------------------
def init_mlp_params(key, in_, out_, hidden_, dtype=jnp.float32):
    """torch.nn.Linear-style init: U(-1/sqrt(fan_in), 1/sqrt(fan_in)).

    Weights stored as (fan_in, fan_out) (transposed vs torch) so the kernel
    computes x @ W + b directly.
    """
    dims = [in_] + list(hidden_) + [out_]
    params = []
    for i in range(len(dims) - 1):
        fan_in, fan_out = dims[i], dims[i + 1]
        key, kw, kb = jax.random.split(key, 3)
        bound = 1.0 / (fan_in ** 0.5)
        w = jax.random.uniform(kw, (fan_in, fan_out), dtype, -bound, bound)
        b = jax.random.uniform(kb, (fan_out,), dtype, -bound, bound)
        params.append((w, b))
    return params


def pack_params(params):
    """Pad every feature dim to a multiple of 128; weights -> bf16, biases -> f32."""
    packed_ws, packed_bs = [], []
    for w, b in params:
        k, n = w.shape
        k_pad, n_pad = _round_up(k, _LANE), _round_up(n, _LANE)
        w_p = jnp.zeros((k_pad, n_pad), jnp.bfloat16).at[:k, :n].set(
            w.astype(jnp.bfloat16))
        b_p = jnp.zeros((1, n_pad), jnp.float32).at[0, :n].set(
            b.astype(jnp.float32))
        packed_ws.append(w_p)
        packed_bs.append(b_p)
    return packed_ws, packed_bs


# ---------------------------------------------------------------------------
# Wrapper helpers
# ---------------------------------------------------------------------------
def _split_groups(ws, bs):
    """Greedy split of the layer chain so each group's resident weights fit VMEM."""
    budget = int(0.6 * _vmem_capacity_bytes())      # ~38 MiB on v7x, ~76 MiB on v5e/v6e
    groups, cur, cur_bytes = [], [], 0
    for i, (w, b) in enumerate(zip(ws, bs)):
        nb = int(w.size) * w.dtype.itemsize + int(b.size) * b.dtype.itemsize
        if cur and cur_bytes + nb > budget:
            groups.append(cur)
            cur, cur_bytes = [], 0
        cur.append(i)
        cur_bytes += nb
    groups.append(cur)
    return groups


def _vmem_budget(ws, bs, tile, k0_pad, n_last_pad, in_bytes, out_bytes):
    w_bytes = sum(int(w.size) * w.dtype.itemsize for w in ws)   # single-buffered residents
    b_bytes = sum(int(b.size) * b.dtype.itemsize for b in bs)
    x_tile = 2 * tile * k0_pad * in_bytes                        # double-buffered input tile
    y_tile = 2 * tile * n_last_pad * out_bytes                   # double-buffered output tile
    widest = max(w.shape[1] for w in ws)
    act = 2 * tile * widest * 6                                  # f32 acc + bf16 copy, 2 live layers
    total = w_bytes + b_bytes + x_tile + y_tile + act + (2 << 20)
    cap = int(0.9 * _vmem_capacity_bytes())
    return min(_round_up(total, 1 << 20), cap)


def _run_group(x_in, ws, bs, tile, m_pad, out_dtype, final_relu):
    rows, feat = x_in.shape
    k0_pad = ws[0].shape[0]
    n_last_pad = ws[-1].shape[1]
    n_layers = len(ws)
    num_tiles = m_pad // tile

    # Only materialize a padded bf16 slab if padding is actually required;
    # otherwise feed x as-is (f32 or bf16) and cast in-kernel.
    if feat != k0_pad or rows != m_pad:
        slab = jnp.zeros((m_pad, k0_pad), jnp.bfloat16)
        x_in = slab.at[:rows, :feat].set(x_in.astype(jnp.bfloat16))

    flat = []
    for w, b in zip(ws, bs):
        flat += [w, b]

    kernel = functools.partial(_fused_mlp_kernel, n_layers=n_layers,
                               final_relu=final_relu)
    out_shape = jax.ShapeDtypeStruct((m_pad, n_last_pad), out_dtype)

    in_bytes = jnp.dtype(x_in.dtype).itemsize
    out_bytes = jnp.dtype(out_dtype).itemsize
    vmem_bytes = _vmem_budget(ws, bs, tile, k0_pad, n_last_pad, in_bytes, out_bytes)

    if num_tiles == 1:
        # Small batch: no grid, no pipeline bookkeeping — full-extent VMEM refs.
        return pl.pallas_call(
            kernel,
            out_shape=out_shape,
            in_specs=[pl.BlockSpec(memory_space=pltpu.MemorySpace.VMEM)]
            * (1 + 2 * n_layers),
            out_specs=pl.BlockSpec(memory_space=pltpu.MemorySpace.VMEM),
            compiler_params=pltpu.CompilerParams(vmem_limit_bytes=vmem_bytes),
        )(x_in, *flat)

    # Realistic batch: 1-D grid over M tiles; weights/biases stay resident
    # (constant block index) and are single-buffered (Buffered(1)).
    in_specs = [pl.BlockSpec((tile, k0_pad), lambda i: (i, 0))]
    for w, b in zip(ws, bs):
        in_specs.append(pl.BlockSpec(w.shape, lambda i: (0, 0),
                                     pipeline_mode=pl.Buffered(1)))
        in_specs.append(pl.BlockSpec(b.shape, lambda i: (0, 0),
                                     pipeline_mode=pl.Buffered(1)))

    # NOTE(v7x): "parallel" lets the runtime shard the batch axis across the
    # two TensorCores; each TC then holds its own resident weight copy.
    return pl.pallas_call(
        kernel,
        out_shape=out_shape,
        grid_spec=pl.GridSpec(
            grid=(num_tiles,),
            in_specs=in_specs,
            out_specs=pl.BlockSpec((tile, n_last_pad), lambda i: (i, 0)),
        ),
        compiler_params=pltpu.CompilerParams(
            dimension_semantics=("parallel",),
            vmem_limit_bytes=vmem_bytes,
        ),
    )(x_in, *flat)


# ---------------------------------------------------------------------------
# Public forward
# ---------------------------------------------------------------------------
@functools.partial(jax.jit, static_argnames=("out_features", "tile_m", "out_dtype"))
def mlp_forward(x, packed_ws, packed_bs, out_features, tile_m=512, out_dtype=None):
    """Fused MLP forward: y = Linear->ReLU->...->Linear applied to x (batch, in_)."""
    batch, _ = x.shape
    out_dtype = x.dtype if out_dtype is None else out_dtype

    # Balanced, 16-aligned M tiling: minimal padding waste, at most one
    # 16-row group of slack beyond the batch.
    m_base = _round_up(max(batch, _ROW_ALIGN), _ROW_ALIGN)
    tile_req = max(_ROW_ALIGN, _round_up(tile_m, _ROW_ALIGN))
    num_tiles = _cdiv(m_base, tile_req)
    tile = _round_up(_cdiv(m_base, num_tiles), _ROW_ALIGN)
    m_pad = num_tiles * tile

    groups = _split_groups(packed_ws, packed_bs)
    h = x
    for gi, idxs in enumerate(groups):
        ws = [packed_ws[i] for i in idxs]
        bs = [packed_bs[i] for i in idxs]
        is_last_group = gi == len(groups) - 1
        g_dtype = out_dtype if is_last_group else jnp.bfloat16
        h = _run_group(h, ws, bs, tile, m_pad, g_dtype, final_relu=not is_last_group)

    return h[:batch, :out_features]


# ---------------------------------------------------------------------------
# Self-test
# ---------------------------------------------------------------------------
def _reference(x, params):
    ref = x.astype(jnp.bfloat16)
    for i, (w, b) in enumerate(params):
        ref = jnp.dot(ref, w.astype(jnp.bfloat16),
                      preferred_element_type=jnp.float32) + b.astype(jnp.float32)
        if i < len(params) - 1:
            ref = jnp.maximum(ref, 0.0).astype(jnp.bfloat16)
    return ref


if __name__ == "__main__":
    key = jax.random.PRNGKey(0)

    # --- Test 1: Mlp(in_=16, out_=8, hidden_=[32, 32]), batch=8 (no-grid path)
    in_, out_, hidden_ = 16, 8, [32, 32]
    batch = 8
    key, kx, kp = jax.random.split(key, 3)
    x = jax.random.normal(kx, (batch, in_), dtype=jnp.float32)
    params = init_mlp_params(kp, in_, out_, hidden_)
    packed_ws, packed_bs = pack_params(params)

    y = mlp_forward(x, packed_ws, packed_bs, out_)
    jax.block_until_ready(y)
    ref = _reference(x, params)
    assert y.shape == (batch, out_)
    assert jnp.allclose(y, ref, atol=1e-2, rtol=1e-2)

    # --- Test 2: gridded path (lane-aligned input, unbalanced batch)
    in2, out2, hidden2 = 128, 64, [256, 256]
    batch2 = 600
    key, kx2, kp2 = jax.random.split(key, 3)
    x2 = jax.random.normal(kx2, (batch2, in2), dtype=jnp.float32)
    params2 = init_mlp_params(kp2, in2, out2, hidden2)
    pw2, pb2 = pack_params(params2)

    y2 = mlp_forward(x2, pw2, pb2, out2, tile_m=256)
    jax.block_until_ready(y2)
    ref2 = _reference(x2, params2)
    assert y2.shape == (batch2, out2)
    assert jnp.allclose(y2, ref2, atol=2e-2, rtol=2e-2)

    print("KERNEL_OK")
</pallas_src>

<mosaic_0001>
module attributes {stable_mosaic.version = 11 : i64} {
  func.func @_fused_mlp_kernel(%arg0: memref<16x128xbf16, #tpu.memory_space<vmem>>, %arg1: memref<128x128xbf16, #tpu.memory_space<vmem>>, %arg2: memref<1x128xf32, #tpu.memory_space<vmem>>, %arg3: memref<128x128xbf16, #tpu.memory_space<vmem>>, %arg4: memref<1x128xf32, #tpu.memory_space<vmem>>, %arg5: memref<128x128xbf16, #tpu.memory_space<vmem>>, %arg6: memref<1x128xf32, #tpu.memory_space<vmem>>, %arg7: memref<16x128xf32, #tpu.memory_space<vmem>>) attributes {dimension_semantics = [], scalar_prefetch = 0 : i64, scratch_operands = 0 : i64, tpu.core_type = #tpu.core_type<tc>} {
    %c0 = arith.constant 0 : index
    %c0_0 = arith.constant 0 : index
    %0 = vector.load %arg0[%c0, %c0_0] : memref<16x128xbf16, #tpu.memory_space<vmem>>, vector<16x128xbf16>
    %c0_1 = arith.constant 0 : index
    %c0_2 = arith.constant 0 : index
    %1 = vector.load %arg1[%c0_1, %c0_2] : memref<128x128xbf16, #tpu.memory_space<vmem>>, vector<128x128xbf16>
    %c0_3 = arith.constant 0 : index
    %c0_4 = arith.constant 0 : index
    %2 = vector.load %arg2[%c0_3, %c0_4] : memref<1x128xf32, #tpu.memory_space<vmem>>, vector<1x128xf32>
    %cst = arith.constant dense<0.000000e+00> : vector<16x128xf32>
    %3 = tpu.matmul %0, %1, %cst {dimension_numbers = #tpu.dot_dimension_numbers<[1], [0], [0], [1], [0, 0, 1, 1], [], []>} : vector<16x128xbf16>, vector<128x128xbf16>, vector<16x128xf32> -> vector<16x128xf32>
    %4 = vector.broadcast %2 : vector<1x128xf32> to vector<16x128xf32>
    %5 = arith.addf %3, %4 : vector<16x128xf32>
    %cst_5 = arith.constant 0.000000e+00 : f32
    %6 = vector.broadcast %cst_5 : f32 to vector<16x128xf32>
    %7 = arith.maximumf %5, %6 : vector<16x128xf32>
    %8 = arith.truncf %7 : vector<16x128xf32> to vector<16x128xbf16>
    %c0_6 = arith.constant 0 : index
    %c0_7 = arith.constant 0 : index
    %9 = vector.load %arg3[%c0_6, %c0_7] : memref<128x128xbf16, #tpu.memory_space<vmem>>, vector<128x128xbf16>
    %c0_8 = arith.constant 0 : index
    %c0_9 = arith.constant 0 : index
    %10 = vector.load %arg4[%c0_8, %c0_9] : memref<1x128xf32, #tpu.memory_space<vmem>>, vector<1x128xf32>
    %cst_10 = arith.constant dense<0.000000e+00> : vector<16x128xf32>
    %11 = tpu.matmul %8, %9, %cst_10 {dimension_numbers = #tpu.dot_dimension_numbers<[1], [0], [0], [1], [0, 0, 1, 1], [], []>} : vector<16x128xbf16>, vector<128x128xbf16>, vector<16x128xf32> -> vector<16x128xf32>
    %12 = vector.broadcast %10 : vector<1x128xf32> to vector<16x128xf32>
    %13 = arith.addf %11, %12 : vector<16x128xf32>
    %cst_11 = arith.constant 0.000000e+00 : f32
    %14 = vector.broadcast %cst_11 : f32 to vector<16x128xf32>
    %15 = arith.maximumf %13, %14 : vector<16x128xf32>
    %16 = arith.truncf %15 : vector<16x128xf32> to vector<16x128xbf16>
    %c0_12 = arith.constant 0 : index
    %c0_13 = arith.constant 0 : index
    %17 = vector.load %arg5[%c0_12, %c0_13] : memref<128x128xbf16, #tpu.memory_space<vmem>>, vector<128x128xbf16>
    %c0_14 = arith.constant 0 : index
    %c0_15 = arith.constant 0 : index
    %18 = vector.load %arg6[%c0_14, %c0_15] : memref<1x128xf32, #tpu.memory_space<vmem>>, vector<1x128xf32>
    %cst_16 = arith.constant dense<0.000000e+00> : vector<16x128xf32>
    %19 = tpu.matmul %16, %17, %cst_16 {dimension_numbers = #tpu.dot_dimension_numbers<[1], [0], [0], [1], [0, 0, 1, 1], [], []>} : vector<16x128xbf16>, vector<128x128xbf16>, vector<16x128xf32> -> vector<16x128xf32>
    %20 = vector.broadcast %18 : vector<1x128xf32> to vector<16x128xf32>
    %21 = arith.addf %19, %20 : vector<16x128xf32>
    %c0_17 = arith.constant 0 : index
    %c0_18 = arith.constant 0 : index
    %22 = vector.load %arg7[%c0_17, %c0_18] : memref<16x128xf32, #tpu.memory_space<vmem>>, vector<16x128xf32>
    tpu.vector_store %arg7[%c0_17, %c0_18], %21 {strides = array<i32>} : memref<16x128xf32, #tpu.memory_space<vmem>>, vector<16x128xf32>,
    return
  }
}

</mosaic_0001>

<llo_original>
// kernel: mlp_forward.1
$region0: #{mlp_forward.1}
  #allocation0 [shape = 'u32[]', space=smem, size = 0x4, offset = 0x4, fixed_abs, tag = 'smem constant byte address 0x4 - core index']
  #allocation1 [shape = 'u32[144,128]{1,0:T(1,128)}', space=vmem, size = 0x12000, scoped, tag = 'internal scratch']
  %s0 = inlined_call_operand.vmem [shape: bf16[16,128], index: 0, kind: input, shape index: {}]
  %s1 = inlined_call_operand.hbm [shape: bf16[128,128], index: 1, kind: input, shape index: {}]
  %s2 = inlined_call_operand.vmem [shape: f32[1,128], index: 2, kind: input, shape index: {}]
  %s3 = inlined_call_operand.hbm [shape: bf16[128,128], index: 3, kind: input, shape index: {}]
  %s4 = inlined_call_operand.vmem [shape: f32[1,128], index: 4, kind: input, shape index: {}]
  %s5 = inlined_call_operand.hbm [shape: bf16[128,128], index: 5, kind: input, shape index: {}]
  %s6 = inlined_call_operand.vmem [shape: f32[1,128], index: 6, kind: input, shape index: {}]
  %s7 = inlined_call_operand.vmem [shape: f32[16,128], index: 7, kind: output, shape index: {}]
  %s8 = sld [smem:[#allocation0]]
  $region50: #{mlp_forward.1} parent=0
    _
  %s10 = ssub.s32 1, %s8
  %s11 = scalar_select 0, %s10, %s8
  $region1: #{mlp_forward.1} parent=0
    #allocation2 [shape = 'u8[32768]{0}', space=vmem, size = 0x8000, scoped, tag = 'input window, operand 1, single buffered']
    #allocation3 [shape = 's32[1]{0}', space=sflag, size = 0x4, scoped, tag = 'scoped memory for mlp_forward.1']
    #allocation4 [shape = 'u8[32768]{0}', space=vmem, size = 0x8000, scoped, tag = 'input window, operand 3, single buffered']
    #allocation5 [shape = 's32[1]{0}', space=sflag, size = 0x4, scoped, tag = 'scoped memory for mlp_forward.1']
    #allocation6 [shape = 'u8[32768]{0}', space=vmem, size = 0x8000, scoped, tag = 'input window, operand 5, single buffered']
    %12 = vsyncpa [#allocation3], 0
    %13 = vsyncpa [#allocation5], 0
    // Predicated region
    $region2: #{mlp_forward.1} parent=1 // pred_check
      _
    $region3: #{mlp_forward.1} parent=1 // pred_check_branch
      %15 = sbr.rel (0) target = $region5
    $region4: #{mlp_forward.1} parent=1 // pred_region
      _
    $region5: #{mlp_forward.1} parent=1 // pred_fallthru
      _
    // Predicated region
    $region6: #{mlp_forward.1} parent=1 // pred_check
      _
    $region7: #{mlp_forward.1} parent=1 // pred_check_branch
      %17 = sbr.rel (0) target = $region9
    $region8: #{mlp_forward.1} parent=1 // pred_region
      %s19 = ssub.s32 1024, 1024
      %20 = vsyncadd [#allocation3], %s19
      %s21 = sshll.u32 [#allocation2], 4
      %s22 = int_to_ptr.vmem [resolvable:$true] %s21
      %27 = dma.hbm_to_vmem [thread:$0]  %s1, 1024, %s22, [#allocation3], 64, 64, 4
    $region9: #{mlp_forward.1} parent=1 // pred_fallthru
      _
    // Predicated region
    $region10: #{mlp_forward.1} parent=1 // pred_check
      _
    $region11: #{mlp_forward.1} parent=1 // pred_check_branch
      %29 = sbr.rel (0) target = $region13
    $region12: #{mlp_forward.1} parent=1 // pred_region
      _
    $region13: #{mlp_forward.1} parent=1 // pred_fallthru
      _
    // Predicated region
    $region14: #{mlp_forward.1} parent=1 // pred_check
      _
    $region15: #{mlp_forward.1} parent=1 // pred_check_branch
      %31 = sbr.rel (0) target = $region17
    $region16: #{mlp_forward.1} parent=1 // pred_region
      %s33 = ssub.s32 1024, 1024
      %34 = vsyncadd [#allocation5], %s33
      %s35 = sshll.u32 [#allocation4], 4
      %s36 = int_to_ptr.vmem [resolvable:$true] %s35
      %41 = dma.hbm_to_vmem [thread:$0]  %s3, 1024, %s36, [#allocation5], 64, 64, 4
    $region17: #{mlp_forward.1} parent=1 // pred_fallthru
      _
    // Predicated region
    $region18: #{mlp_forward.1} parent=1 // pred_check
      _
    $region19: #{mlp_forward.1} parent=1 // pred_check_branch
      %43 = sbr.rel (0) target = $region21
    $region20: #{mlp_forward.1} parent=1 // pred_region
      _
    $region21: #{mlp_forward.1} parent=1 // pred_fallthru
      _
    // Predicated region
    $region22: #{mlp_forward.1} parent=1 // pred_check
      _
    $region23: #{mlp_forward.1} parent=1 // pred_check_branch
      %45 = sbr.rel (0) target = $region25
    $region24: #{mlp_forward.1} parent=1 // pred_region
      %s47 = ssub.s32 1024, 1024
      %48 = vsyncadd [#allocation5], %s47
      %s49 = sshll.u32 [#allocation6], 4
      %s50 = int_to_ptr.vmem [resolvable:$true] %s49
      %55 = dma.hbm_to_vmem [thread:$0]  %s5, 1024, %s50, [#allocation5], 64, 64, 4
    $region25: #{mlp_forward.1} parent=1 // pred_fallthru
      _
    // Predicated region
    $region26: #{mlp_forward.1} parent=1 // pred_check
      _
    $region27: #{mlp_forward.1} parent=1 // pred_check_branch
      %57 = sbr.rel (0) target = $region29
    $region28: #{mlp_forward.1} parent=1 // pred_region
      _
    $region29: #{mlp_forward.1} parent=1 // pred_fallthru
      _
    // Predicated region
    $region30: #{mlp_forward.1} parent=1 // pred_check
      _
    $region31: #{mlp_forward.1} parent=1 // pred_check_branch
      %59 = sbr.rel (0) target = $region33
    $region32: #{mlp_forward.1} parent=1 // pred_region
      %60 = dma.done [#allocation3], 1024
    $region33: #{mlp_forward.1} parent=1 // pred_fallthru
      _
    // Predicated region
    $region34: #{mlp_forward.1} parent=1 // pred_check
      _
    $region35: #{mlp_forward.1} parent=1 // pred_check_branch
      %62 = sbr.rel (0) target = $region37
    $region36: #{mlp_forward.1} parent=1 // pred_region
      %63 = dma.done [#allocation5], 1024
    $region37: #{mlp_forward.1} parent=1 // pred_fallthru
      _
    // Predicated region
    $region38: #{mlp_forward.1} parent=1 // pred_check
      _
    $region39: #{mlp_forward.1} parent=1 // pred_check_branch
      %65 = sbr.rel (0) target = $region41
    $region40: #{mlp_forward.1} parent=1 // pred_region
      %66 = dma.done [#allocation5], 1024
    $region41: #{mlp_forward.1} parent=1 // pred_fallthru
      _
    %v68 = vld [vmem:[%s0] sm:$0xf]
    %v69 = vld [vmem:[%s0 + $0x4] sm:$0xf]
    %v70 = vld [vmem:[#allocation2] sm:$0xf]
    %v71 = vld [vmem:[#allocation2 + $0x4] sm:$0xf]
    %v72 = vld [vmem:[#allocation2 + $0x8] sm:$0xf]
    %v73 = vld [vmem:[#allocation2 + $0xc] sm:$0xf]
    %v74 = vld [vmem:[#allocation2 + $0x10] sm:$0xf]
    %v75 = vld [vmem:[#allocation2 + $0x14] sm:$0xf]
    %v76 = vld [vmem:[#allocation2 + $0x18] sm:$0xf]
    %v77 = vld [vmem:[#allocation2 + $0x1c] sm:$0xf]
    %v78 = vld [vmem:[#allocation2 + $0x20] sm:$0xf]
    %v79 = vld [vmem:[#allocation2 + $0x24] sm:$0xf]
    %v80 = vld [vmem:[#allocation2 + $0x28] sm:$0xf]
    %v81 = vld [vmem:[#allocation2 + $0x2c] sm:$0xf]
    %v82 = vld [vmem:[#allocation2 + $0x30] sm:$0xf]
    %v83 = vld [vmem:[#allocation2 + $0x34] sm:$0xf]
    %v84 = vld [vmem:[#allocation2 + $0x38] sm:$0xf]
    %v85 = vld [vmem:[#allocation2 + $0x3c] sm:$0xf]
    %v86 = vld [vmem:[%s2] sm:$0x1]
    %v88 = vlaneseq
    %v89 = vshrl.u32 %v88, 7
    %v90 = vsub.s32 0, %v89
    %v91 = vrot.slane %v86, %v90
    %v95 = vunpack.c.l.b16 %v68
    %v96 = vunpack.c.l.b16 %v69
    %v97 = vpack.c.b16 %v96, %v95
    %v115 = vunpack.c.l.b16 %v70
    %v116 = vunpack.c.l.b16 %v71
    %v117 = vunpack.c.l.b16 %v72
    %v118 = vunpack.c.l.b16 %v73
    %v119 = vunpack.c.l.b16 %v74
    %v120 = vunpack.c.l.b16 %v75
    %v121 = vunpack.c.l.b16 %v76
    %v122 = vunpack.c.l.b16 %v77
    %v123 = vunpack.c.l.b16 %v78
    %v124 = vunpack.c.l.b16 %v79
    %v125 = vunpack.c.l.b16 %v80
    %v126 = vunpack.c.l.b16 %v81
    %v127 = vunpack.c.l.b16 %v82
    %v128 = vunpack.c.l.b16 %v83
    %v129 = vunpack.c.l.b16 %v84
    %v130 = vunpack.c.l.b16 %v85
    %v131 = vpack.c.b16 %v116, %v115
    %v132 = vpack.c.b16 %v118, %v117
    %v133 = vpack.c.b16 %v120, %v119
    %v134 = vpack.c.b16 %v122, %v121
    %v135 = vpack.c.b16 %v124, %v123
    %v136 = vpack.c.b16 %v126, %v125
    %v137 = vpack.c.b16 %v128, %v127
    %v138 = vpack.c.b16 %v130, %v129
    %147 = vmatprep.subr.bf16.mxu0 0
    %148 = vmatpush1.bf16.msra.mxu0 %v131
    %149 = vmatprep.subr.bf16.mxu0 0
    %150 = vmatpush1.bf16.msra.mxu0 %v132
    %151 = vmatprep.subr.bf16.mxu0 0
    %152 = vmatpush1.bf16.msra.mxu0 %v133
    %153 = vmatprep.subr.bf16.mxu0 0
    %154 = vmatpush1.bf16.msra.mxu0 %v134
    %155 = vmatprep.subr.bf16.mxu0 0
    %156 = vmatpush1.bf16.msra.mxu0 %v135
    %157 = vmatprep.subr.bf16.mxu0 0
    %158 = vmatpush1.bf16.msra.mxu0 %v136
    %159 = vmatprep.subr.bf16.mxu0 0
    %160 = vmatpush1.bf16.msra.mxu0 %v137
    %161 = vmatprep.subr.bf16.mxu0 0
    %162 = vmatpush1.bf16.msra.mxu0 %v138
    %163 = vmatprep.subr.bf16.mxu0 0
    %164 = vmatpush1.bf16.msra.mxu0 0
    %165 = vmatprep.subr.bf16.mxu0 0
    %166 = vmatpush1.bf16.msra.mxu0 0
    %167 = vmatprep.subr.bf16.mxu0 0
    %168 = vmatpush1.bf16.msra.mxu0 0
    %169 = vmatprep.subr.bf16.mxu0 0
    %170 = vmatpush1.bf16.msra.mxu0 0
    %171 = vmatprep.subr.bf16.mxu0 0
    %172 = vmatpush1.bf16.msra.mxu0 0
    %173 = vmatprep.subr.bf16.mxu0 0
    %174 = vmatpush1.bf16.msra.mxu0 0
    %175 = vmatprep.subr.bf16.mxu0 0
    %176 = vmatpush1.bf16.msra.mxu0 0
    %177 = vmatprep.subr.bf16.mxu0 0
    %178 = vmatpush1.bf16.msra.mxu0 0
    %179 = vmatprep.mubr.bf16.mxu0 0
    %180 = vmatmul.mubr.bf16.gmra.mrb[0].mxu0 %v97
    %v181 = vpop.f32.mrb[0].mxu0
    %v182 = vadd.f32 %v91, %v181
    %v183 = vpop.f32.mrb[0].mxu0
    %v184 = vpop.f32.mrb[0].mxu0
    %v185 = vadd.f32 %v91, %v184
    %v186 = vpop.f32.mrb[0].mxu0
    %187 = vdwg.mxu0
    %v188 = vmax.f32 %v182, 0.0
    %v189 = vmax.f32 %v185, 0.0
    %v190 = vpack.c.bf16 %v189, %v188
    %v191 = vld [vmem:[#allocation4] sm:$0xf]
    %v192 = vld [vmem:[#allocation4 + $0x4] sm:$0xf]
    %v193 = vld [vmem:[#allocation4 + $0x8] sm:$0xf]
    %v194 = vld [vmem:[#allocation4 + $0xc] sm:$0xf]
    %v195 = vld [vmem:[#allocation4 + $0x10] sm:$0xf]
    %v196 = vld [vmem:[#allocation4 + $0x14] sm:$0xf]
    %v197 = vld [vmem:[#allocation4 + $0x18] sm:$0xf]
    %v198 = vld [vmem:[#allocation4 + $0x1c] sm:$0xf]
    %v199 = vld [vmem:[#allocation4 + $0x20] sm:$0xf]
    %v200 = vld [vmem:[#allocation4 + $0x24] sm:$0xf]
    %v201 = vld [vmem:[#allocation4 + $0x28] sm:$0xf]
    %v202 = vld [vmem:[#allocation4 + $0x2c] sm:$0xf]
    %v203 = vld [vmem:[#allocation4 + $0x30] sm:$0xf]
    %v204 = vld [vmem:[#allocation4 + $0x34] sm:$0xf]
    %v205 = vld [vmem:[#allocation4 + $0x38] sm:$0xf]
    %v206 = vld [vmem:[#allocation4 + $0x3c] sm:$0xf]
    %v207 = vld [vmem:[%s4] sm:$0x1]
    %v209 = vlaneseq
    %v210 = vshrl.u32 %v209, 7
    %v211 = vsub.s32 0, %v210
    %v212 = vrot.slane %v207, %v211
    %v230 = vunpack.c.l.b16 %v191
    %v231 = vunpack.c.l.b16 %v192
    %v232 = vunpack.c.l.b16 %v193
    %v233 = vunpack.c.l.b16 %v194
    %v234 = vunpack.c.l.b16 %v195
    %v235 = vunpack.c.l.b16 %v196
    %v236 = vunpack.c.l.b16 %v197
    %v237 = vunpack.c.l.b16 %v198
    %v238 = vunpack.c.l.b16 %v199
    %v239 = vunpack.c.l.b16 %v200
    %v240 = vunpack.c.l.b16 %v201
    %v241 = vunpack.c.l.b16 %v202
    %v242 = vunpack.c.l.b16 %v203
    %v243 = vunpack.c.l.b16 %v204
    %v244 = vunpack.c.l.b16 %v205
    %v245 = vunpack.c.l.b16 %v206
    %v246 = vpack.c.b16 %v231, %v230
    %v247 = vpack.c.b16 %v233, %v232
    %v248 = vpack.c.b16 %v235, %v234
    %v249 = vpack.c.b16 %v237, %v236
    %v250 = vpack.c.b16 %v239, %v238
    %v251 = vpack.c.b16 %v241, %v240
    %v252 = vpack.c.b16 %v243, %v242
    %v253 = vpack.c.b16 %v245, %v244
    %262 = vmatprep.subr.bf16.mxu0 0
    %263 = vmatpush1.bf16.msra.mxu0 %v246
    %264 = vmatprep.subr.bf16.mxu0 0
    %265 = vmatpush1.bf16.msra.mxu0 %v247
    %266 = vmatprep.subr.bf16.mxu0 0
    %267 = vmatpush1.bf16.msra.mxu0 %v248
    %268 = vmatprep.subr.bf16.mxu0 0
    %269 = vmatpush1.bf16.msra.mxu0 %v249
    %270 = vmatprep.subr.bf16.mxu0 0
    %271 = vmatpush1.bf16.msra.mxu0 %v250
    %272 = vmatprep.subr.bf16.mxu0 0
    %273 = vmatpush1.bf16.msra.mxu0 %v251
    %274 = vmatprep.subr.bf16.mxu0 0
    %275 = vmatpush1.bf16.msra.mxu0 %v252
    %276 = vmatprep.subr.bf16.mxu0 0
    %277 = vmatpush1.bf16.msra.mxu0 %v253
    %278 = vmatprep.subr.bf16.mxu0 0
    %279 = vmatpush1.bf16.msra.mxu0 0
    %280 = vmatprep.subr.bf16.mxu0 0
    %281 = vmatpush1.bf16.msra.mxu0 0
    %282 = vmatprep.subr.bf16.mxu0 0
    %283 = vmatpush1.bf16.msra.mxu0 0
    %284 = vmatprep.subr.bf16.mxu0 0
    %285 = vmatpush1.bf16.msra.mxu0 0
    %286 = vmatprep.subr.bf16.mxu0 0
    %287 = vmatpush1.bf16.msra.mxu0 0
    %288 = vmatprep.subr.bf16.mxu0 0
    %289 = vmatpush1.bf16.msra.mxu0 0
    %290 = vmatprep.subr.bf16.mxu0 0
    %291 = vmatpush1.bf16.msra.mxu0 0
    %292 = vmatprep.subr.bf16.mxu0 0
    %293 = vmatpush1.bf16.msra.mxu0 0
    %294 = vmatprep.mubr.bf16.mxu0 0
    %295 = vmatmul.mubr.bf16.gmra.mrb[0].mxu0 %v190
    %v296 = vpop.f32.mrb[0].mxu0
    %v297 = vadd.f32 %v212, %v296
    %v298 = vpop.f32.mrb[0].mxu0
    %v299 = vpop.f32.mrb[0].mxu0
    %v300 = vadd.f32 %v212, %v299
    %v301 = vpop.f32.mrb[0].mxu0
    %302 = vdwg.mxu0
    %v303 = vmax.f32 %v297, 0.0
    %v304 = vmax.f32 %v300, 0.0
    %v305 = vpack.c.bf16 %v304, %v303
    %v306 = vld [vmem:[#allocation6] sm:$0xf]
    %v307 = vld [vmem:[#allocation6 + $0x4] sm:$0xf]
    %v308 = vld [vmem:[#allocation6 + $0x8] sm:$0xf]
    %v309 = vld [vmem:[#allocation6 + $0xc] sm:$0xf]
    %v310 = vld [vmem:[#allocation6 + $0x10] sm:$0xf]
    %v311 = vld [vmem:[#allocation6 + $0x14] sm:$0xf]
    %v312 = vld [vmem:[#allocation6 + $0x18] sm:$0xf]
    %v313 = vld [vmem:[#allocation6 + $0x1c] sm:$0xf]
    %v314 = vld [vmem:[#allocation6 + $0x20] sm:$0xf]
    %v315 = vld [vmem:[#allocation6 + $0x24] sm:$0xf]
    %v316 = vld [vmem:[#allocation6 + $0x28] sm:$0xf]
    %v317 = vld [vmem:[#allocation6 + $0x2c] sm:$0xf]
    %v318 = vld [vmem:[#allocation6 + $0x30] sm:$0xf]
    %v319 = vld [vmem:[#allocation6 + $0x34] sm:$0xf]
    %v320 = vld [vmem:[#allocation6 + $0x38] sm:$0xf]
    %v321 = vld [vmem:[#allocation6 + $0x3c] sm:$0xf]
    %v322 = vld [vmem:[%s6] sm:$0x1]
    %v324 = vlaneseq
    %v325 = vshrl.u32 %v324, 7
    %v326 = vsub.s32 0, %v325
    %v327 = vrot.slane %v322, %v326
    %v345 = vunpack.c.l.b16 %v306
    %v346 = vunpack.c.l.b16 %v307
    %v347 = vunpack.c.l.b16 %v308
    %v348 = vunpack.c.l.b16 %v309
    %v349 = vunpack.c.l.b16 %v310
    %v350 = vunpack.c.l.b16 %v311
    %v351 = vunpack.c.l.b16 %v312
    %v352 = vunpack.c.l.b16 %v313
    %v353 = vunpack.c.l.b16 %v314
    %v354 = vunpack.c.l.b16 %v315
    %v355 = vunpack.c.l.b16 %v316
    %v356 = vunpack.c.l.b16 %v317
    %v357 = vunpack.c.l.b16 %v318
    %v358 = vunpack.c.l.b16 %v319
    %v359 = vunpack.c.l.b16 %v320
    %v360 = vunpack.c.l.b16 %v321
    %v361 = vpack.c.b16 %v346, %v345
    %v362 = vpack.c.b16 %v348, %v347
    %v363 = vpack.c.b16 %v350, %v349
    %v364 = vpack.c.b16 %v352, %v351
    %v365 = vpack.c.b16 %v354, %v353
    %v366 = vpack.c.b16 %v356, %v355
    %v367 = vpack.c.b16 %v358, %v357
    %v368 = vpack.c.b16 %v360, %v359
    %377 = vmatprep.subr.bf16.mxu0 0
    %378 = vmatpush1.bf16.msra.mxu0 %v361
    %379 = vmatprep.subr.bf16.mxu0 0
    %380 = vmatpush1.bf16.msra.mxu0 %v362
    %381 = vmatprep.subr.bf16.mxu0 0
    %382 = vmatpush1.bf16.msra.mxu0 %v363
    %383 = vmatprep.subr.bf16.mxu0 0
    %384 = vmatpush1.bf16.msra.mxu0 %v364
    %385 = vmatprep.subr.bf16.mxu0 0
    %386 = vmatpush1.bf16.msra.mxu0 %v365
    %387 = vmatprep.subr.bf16.mxu0 0
    %388 = vmatpush1.bf16.msra.mxu0 %v366
    %389 = vmatprep.subr.bf16.mxu0 0
    %390 = vmatpush1.bf16.msra.mxu0 %v367
    %391 = vmatprep.subr.bf16.mxu0 0
    %392 = vmatpush1.bf16.msra.mxu0 %v368
    %393 = vmatprep.subr.bf16.mxu0 0
    %394 = vmatpush1.bf16.msra.mxu0 0
    %395 = vmatprep.subr.bf16.mxu0 0
    %396 = vmatpush1.bf16.msra.mxu0 0
    %397 = vmatprep.subr.bf16.mxu0 0
    %398 = vmatpush1.bf16.msra.mxu0 0
    %399 = vmatprep.subr.bf16.mxu0 0
    %400 = vmatpush1.bf16.msra.mxu0 0
    %401 = vmatprep.subr.bf16.mxu0 0
    %402 = vmatpush1.bf16.msra.mxu0 0
    %403 = vmatprep.subr.bf16.mxu0 0
    %404 = vmatpush1.bf16.msra.mxu0 0
    %405 = vmatprep.subr.bf16.mxu0 0
    %406 = vmatpush1.bf16.msra.mxu0 0
    %407 = vmatprep.subr.bf16.mxu0 0
    %408 = vmatpush1.bf16.msra.mxu0 0
    %409 = vmatprep.mubr.bf16.mxu0 0
    %410 = vmatmul.mubr.bf16.gmra.mrb[0].mxu0 %v305
    %v411 = vpop.f32.mrb[0].mxu0
    %v412 = vadd.f32 %v327, %v411
    %v413 = vpop.f32.mrb[0].mxu0
    %v414 = vpop.f32.mrb[0].mxu0
    %v415 = vadd.f32 %v327, %v414
    %v416 = vpop.f32.mrb[0].mxu0
    %417 = vdwg.mxu0
    %418 = vst [vmem:[%s7] sm:$0xff] %v412
    %419 = vst [vmem:[%s7 + $0x8] sm:$0xff] %v415
    // Predicated region
    $region42: #{mlp_forward.1} parent=1 // pred_check
      _
    $region43: #{mlp_forward.1} parent=1 // pred_check_branch
      %421 = sbr.rel (0) target = $region45
    $region44: #{mlp_forward.1} parent=1 // pred_region
      _
    $region45: #{mlp_forward.1} parent=1 // pred_fallthru
      _
    // Predicated region
    $region46: #{mlp_forward.1} parent=1 // pred_check
      _
    $region47: #{mlp_forward.1} parent=1 // pred_check_branch
      %423 = sbr.rel (0) target = $region49
    $region48: #{mlp_forward.1} parent=1 // pred_region
      _
    $region49: #{mlp_forward.1} parent=1 // pred_fallthru
      _
    %424 = vsyncpa [#allocation3], 1
    %425 = vsyncpa [#allocation5], 1

</llo_original>
